<compile_context>
chip_gen: v5e
topology: v5e:2x2
jax: 0.10.0
libtpu: 0.0.40
codegen_flags: <defaults>
</compile_context>

<pallas_src>
import jax
import jax.numpy as jnp
from jax import lax
from jax.experimental import pallas as pl
from jax.experimental.pallas import tpu as pltpu


def _round_up(x, m):
    return ((x + m - 1) // m) * m


def embedding_mask_kernel(ids_ref, w_ref, m_ref, o_ref):
    # ids_ref : VMEM (tile, 1) int32  -- token ids for this output tile
    # w_ref   : VMEM (V, D)           -- full embedding table (resident)
    # m_ref   : VMEM (1, D)           -- vector_input mask, broadcast over vocab
    # o_ref   : VMEM (tile, D)        -- output tile
    tile = o_ref.shape[0]
    V = w_ref.shape[0]

    ids = ids_ref[...]  # (tile, 1)
    # One-hot selection matrix; rows for out-of-range ids are all zero (safe).
    onehot = (ids == lax.broadcasted_iota(jnp.int32, (tile, V), 1)).astype(w_ref.dtype)

    # Mask the whole table once per grid step (V*D elems, negligible), then a
    # single MXU matmul performs the row gather with a lane-dense full-tile store.
    masked = w_ref[...] * m_ref[...]  # (V, D)
    o_ref[...] = jnp.dot(
        onehot,
        masked,
        preferred_element_type=jnp.float32,
        precision=lax.Precision.HIGHEST,  # keep f32 gather exact
    ).astype(o_ref.dtype)


def embedding_with_mask(input_ids, weight, mask_vec, *, tile=256):
    """JAX wrapper reproducing EmbeddingWithMask.forward (mode='vector_input')."""
    B, S = input_ids.shape
    V, D = weight.shape
    N = B * S

    # Pick a tile that is a multiple of 8 sublanes and no larger than needed,
    # then pad the token stream to a tile multiple (pad ids = 0, sliced off).
    tile = max(8, min(_round_up(tile, 8), _round_up(N, 8)))
    n_pad = _round_up(N, tile)

    ids = input_ids.reshape(N).astype(jnp.int32)
    ids = jnp.pad(ids, (0, n_pad - N)).reshape(n_pad, 1)
    mask2d = mask_vec.reshape(1, D).astype(weight.dtype)

    out = pl.pallas_call(
        embedding_mask_kernel,
        out_shape=jax.ShapeDtypeStruct((n_pad, D), weight.dtype),
        grid_spec=pltpu.PrefetchScalarGridSpec(
            num_scalar_prefetch=0,
            grid=(n_pad // tile,),
            in_specs=[
                pl.BlockSpec((tile, 1), lambda i: (i, 0)),  # ids tile (VMEM)
                pl.BlockSpec((V, D), lambda i: (0, 0)),     # whole table resident
                pl.BlockSpec((1, D), lambda i: (0, 0)),     # mask vector
            ],
            out_specs=pl.BlockSpec((tile, D), lambda i: (i, 0)),
        ),
        compiler_params=pltpu.CompilerParams(
            # Every output tile is independent -> let v7x shard across both TCs.
            dimension_semantics=("parallel",),
        ),
    )(ids, weight, mask2d)

    return out[:N].reshape(B, S, D)


if __name__ == "__main__":
    # Small, deterministic setup consistent with the module:
    #   vocab V=64, embed dim D=128, batch B=2, seq S=8.
    key = jax.random.PRNGKey(0)
    k_w, k_m, k_ids, k_ids2 = jax.random.split(key, 4)

    V, D = 64, 128
    weight = jax.random.normal(k_w, (V, D), dtype=jnp.float32)   # nn.Embedding.weight
    mask_vec = jax.random.uniform(k_m, (D,), dtype=jnp.float32)  # Mask(mode='vector_input').weight

    # Case 1: standard small batch.
    B, S = 2, 8
    input_ids = jax.random.randint(k_ids, (B, S), 0, V, dtype=jnp.int32)
    out = jax.block_until_ready(embedding_with_mask(input_ids, weight, mask_vec))
    ref = (weight * mask_vec[None, :])[input_ids.reshape(-1)].reshape(B, S, D)
    assert out.shape == (B, S, D), out.shape
    assert jnp.allclose(out, ref, atol=1e-5, rtol=1e-5), "mismatch vs reference (case 1)"

    # Case 2: ragged token count (exercises tail padding path).
    B2, S2 = 3, 5
    input_ids2 = jax.random.randint(k_ids2, (B2, S2), 0, V, dtype=jnp.int32)
    out2 = jax.block_until_ready(embedding_with_mask(input_ids2, weight, mask_vec))
    ref2 = (weight * mask_vec[None, :])[input_ids2.reshape(-1)].reshape(B2, S2, D)
    assert out2.shape == (B2, S2, D), out2.shape
    assert jnp.allclose(out2, ref2, atol=1e-5, rtol=1e-5), "mismatch vs reference (case 2)"

    print("KERNEL_OK")
</pallas_src>

<mosaic_0001>
module attributes {stable_mosaic.version = 11 : i64} {
  func.func @embedding_mask_kernel(%arg0: i32, %arg1: memref<16x1xi32, #tpu.memory_space<vmem>>, %arg2: memref<64x128xf32, #tpu.memory_space<vmem>>, %arg3: memref<1x128xf32, #tpu.memory_space<vmem>>, %arg4: memref<16x128xf32, #tpu.memory_space<vmem>>) attributes {dimension_semantics = [#tpu.dimension_semantics<parallel>], iteration_bounds = array<i64: 1>, scalar_prefetch = 0 : i64, scratch_operands = 0 : i64, tpu.core_type = #tpu.core_type<tc>, window_params = [{transform_indices = @transform_0, window_bounds = array<i64: 16, 1>}, {pipeline_mode = #tpu.pipeline_mode<synchronous>, transform_indices = @transform_1, window_bounds = array<i64: 64, 128>}, {pipeline_mode = #tpu.pipeline_mode<synchronous>, transform_indices = @transform_2, window_bounds = array<i64: 1, 128>}, {transform_indices = @transform_3, window_bounds = array<i64: 16, 128>}]} {
    %c0 = arith.constant 0 : index
    %c0_0 = arith.constant 0 : index
    %0 = vector.load %arg1[%c0, %c0_0] : memref<16x1xi32, #tpu.memory_space<vmem>>, vector<16x1xi32>
    %1 = tpu.iota {dimensions = array<i32: 1>} : vector<16x64xi32>
    %2 = vector.broadcast %0 : vector<16x1xi32> to vector<16x64xi32>
    %3 = arith.cmpi eq, %2, %1 : vector<16x64xi32>
    %4 = arith.extui %3 : vector<16x64xi1> to vector<16x64xi32>
    %5 = arith.sitofp %4 : vector<16x64xi32> to vector<16x64xf32>
    %c0_1 = arith.constant 0 : index
    %c0_2 = arith.constant 0 : index
    %6 = vector.load %arg2[%c0_1, %c0_2] : memref<64x128xf32, #tpu.memory_space<vmem>>, vector<64x128xf32>
    %c0_3 = arith.constant 0 : index
    %c0_4 = arith.constant 0 : index
    %7 = vector.load %arg3[%c0_3, %c0_4] : memref<1x128xf32, #tpu.memory_space<vmem>>, vector<1x128xf32>
    %8 = vector.broadcast %7 : vector<1x128xf32> to vector<64x128xf32>
    %9 = arith.mulf %6, %8 : vector<64x128xf32>
    %cst = arith.constant dense<0.000000e+00> : vector<16x128xf32>
    %10 = tpu.matmul %5, %9, %cst {dimension_numbers = #tpu.dot_dimension_numbers<[1], [0], [0], [1], [0, 0, 1, 1], [], []>, precision = #tpu.contract_precision<fp32>} : vector<16x64xf32>, vector<64x128xf32>, vector<16x128xf32> -> vector<16x128xf32>
    %c0_5 = arith.constant 0 : index
    %c0_6 = arith.constant 0 : index
    %11 = vector.load %arg4[%c0_5, %c0_6] : memref<16x128xf32, #tpu.memory_space<vmem>>, vector<16x128xf32>
    tpu.vector_store %arg4[%c0_5, %c0_6], %10 {strides = array<i32>} : memref<16x128xf32, #tpu.memory_space<vmem>>, vector<16x128xf32>,
    return
  }
  func.func @transform_0(%arg0: i32) -> (i32, i32) {
    %c0_i32 = arith.constant 0 : i32
    %c0_i32_0 = arith.constant 0 : i32
    return %arg0, %c0_i32 : i32, i32
  }
  func.func @transform_1(%arg0: i32) -> (i32, i32) {
    %c0_i32 = arith.constant 0 : i32
    %c0_i32_0 = arith.constant 0 : i32
    %c0_i32_1 = arith.constant 0 : i32
    return %c0_i32, %c0_i32_0 : i32, i32
  }
  func.func @transform_2(%arg0: i32) -> (i32, i32) {
    %c0_i32 = arith.constant 0 : i32
    %c0_i32_0 = arith.constant 0 : i32
    %c0_i32_1 = arith.constant 0 : i32
    return %c0_i32, %c0_i32_0 : i32, i32
  }
  func.func @transform_3(%arg0: i32) -> (i32, i32) {
    %c0_i32 = arith.constant 0 : i32
    %c0_i32_0 = arith.constant 0 : i32
    return %arg0, %c0_i32 : i32, i32
  }
}

</mosaic_0001>

<llo_original>
// kernel: tpu_custom_call.1
$region0: #{tpu_custom_call.1}
  #allocation0 [shape = 'u32[]', space=smem, size = 0x4, offset = 0x4, fixed_abs, tag = 'smem constant byte address 0x4 - core index']
  #allocation1 [shape = 'u32[72,128]{1,0:T(1,128)}', space=vmem, size = 0x9000, scoped, tag = 'internal scratch']
  %s0 = inlined_call_operand.vmem [shape: s32[16,1], index: 0, kind: input, shape index: {}]
  %s1 = inlined_call_operand.hbm [shape: f32[64,128], index: 1, kind: input, shape index: {}]
  %s2 = inlined_call_operand.vmem [shape: f32[1,128], index: 2, kind: input, shape index: {}]
  %s3 = inlined_call_operand.hbm [shape: f32[16,128], index: 3, kind: output, shape index: {}]
  %s4 = sld [smem:[#allocation0]]
  $region26: #{tpu_custom_call.1} parent=0
    _
  %s6 = ssub.s32 1, %s4
  %s7 = scalar_select 0, %s6, %s4
  $region1: #{tpu_custom_call.1} parent=0
    #allocation2 [shape = 'u8[32768]{0}', space=vmem, size = 0x8000, scoped, tag = 'input window, operand 1, single buffered']
    #allocation3 [shape = 's32[1]{0}', space=sflag, size = 0x4, scoped, tag = 'scoped memory for tpu_custom_call.1']
    #allocation4 [shape = 's32[1]{0}', space=sflag, size = 0x4, scoped, tag = 'scoped memory for tpu_custom_call.1']
    #allocation5 [shape = 'u8[8192]{0}', space=vmem, size = 0x2000, scoped, tag = 'output window, operand 0, single buffered']
    %8 = vsyncpa [#allocation3], 0
    %9 = vsyncpa [#allocation4], 0
    // Predicated region
    $region2: #{tpu_custom_call.1} parent=1 // pred_check
      _
    $region3: #{tpu_custom_call.1} parent=1 // pred_check_branch
      %11 = sbr.rel (0) target = $region5
    $region4: #{tpu_custom_call.1} parent=1 // pred_region
      _
    $region5: #{tpu_custom_call.1} parent=1 // pred_fallthru
      _
    // Predicated region
    $region6: #{tpu_custom_call.1} parent=1 // pred_check
      _
    $region7: #{tpu_custom_call.1} parent=1 // pred_check_branch
      %13 = sbr.rel (0) target = $region9
    $region8: #{tpu_custom_call.1} parent=1 // pred_region
      %15 = vsyncadd [#allocation3], 0
      %s16 = sshll.u32 %s1, 4
      %s17 = int_to_ptr.hbm [resolvable:$true] %s16
      %s18 = sshll.u32 [#allocation2], 4
      %s19 = int_to_ptr.vmem [resolvable:$true] %s18
      %24 = dma.hbm_to_vmem [thread:$0]  %s17, 1024, %s19, [#allocation3], 128, 128, 8
    $region9: #{tpu_custom_call.1} parent=1 // pred_fallthru
      _
    // Predicated region
    $region10: #{tpu_custom_call.1} parent=1 // pred_check
      _
    $region11: #{tpu_custom_call.1} parent=1 // pred_check_branch
      %26 = sbr.rel (0) target = $region13
    $region12: #{tpu_custom_call.1} parent=1 // pred_region
      _
    $region13: #{tpu_custom_call.1} parent=1 // pred_fallthru
      _
    // Predicated region
    $region14: #{tpu_custom_call.1} parent=1 // pred_check
      _
    $region15: #{tpu_custom_call.1} parent=1 // pred_check_branch
      %28 = sbr.rel (0) target = $region17
    $region16: #{tpu_custom_call.1} parent=1 // pred_region
      %30 = dma.done [#allocation3], 1024
    $region17: #{tpu_custom_call.1} parent=1 // pred_fallthru
      _
    %v31 = vld [vmem:[%s0] sm:$0xff]
    %v32 = vld [vmem:[%s0 + $0x8] sm:$0xff]
    %v33 = vlaneseq
    %v34 = vand.u32 %v33, 127
    %35 = vset.pattern.permute.xlu0 0
    %36 = vperm.xlu0 %35, %v31
    %v37 = vpop.permute.xlu0 %36
    %38 = vset.pattern.permute.xlu0 0
    %39 = vperm.xlu0 %38, %v32
    %v40 = vpop.permute.xlu0 %39
    %vm41 = vcmp.eq.s32.totalorder %v37, %v34
    %vm42 = vcmp.eq.s32.totalorder %v40, %v34
    %v43 = vsel %vm41, 1, 0
    %v44 = vsel %vm42, 1, 0
    %v45 = vcvt.s32.f32 %v43
    %v46 = vcvt.s32.f32 %v44
    %v47 = vld [vmem:[#allocation2] sm:$0xff]
    %v48 = vld [vmem:[#allocation2 + $0x8] sm:$0xff]
    %v49 = vld [vmem:[#allocation2 + $0x10] sm:$0xff]
    %v50 = vld [vmem:[#allocation2 + $0x18] sm:$0xff]
    %v51 = vld [vmem:[#allocation2 + $0x20] sm:$0xff]
    %v52 = vld [vmem:[#allocation2 + $0x28] sm:$0xff]
    %v53 = vld [vmem:[#allocation2 + $0x30] sm:$0xff]
    %v54 = vld [vmem:[#allocation2 + $0x38] sm:$0xff]
    %v55 = vld [vmem:[%s2] sm:$0x1]
    %v57 = vperm.slane %v55, 0
    %v59 = vmul.f32 %v47, %v57
    %v60 = vmul.f32 %v48, %v57
    %v61 = vmul.f32 %v49, %v57
    %v62 = vmul.f32 %v50, %v57
    %v63 = vmul.f32 %v51, %v57
    %v64 = vmul.f32 %v52, %v57
    %v65 = vmul.f32 %v53, %v57
    %v66 = vmul.f32 %v54, %v57
    %vm67 = vcmask 523264
    %v69 = vsel %vm67, %v45, 0
    %v72 = vsel %vm67, %v46, 0
    %74 = vmatpush.msra.mxu0 0.0
    %75 = vmatpush.msra.mxu0 0.0
    %76 = vmatpush.msra.mxu0 0.0
    %77 = vmatpush.msra.mxu0 0.0
    %78 = vmatpush.msra.mxu0 0.0
    %79 = vmatpush.msra.mxu0 0.0
    %80 = vmatpush.msra.mxu0 0.0
    %81 = vmatpush.msra.mxu0 0.0
    %v82 = vand.u32 %v66, 4294901760
    %83 = vmatpush.msra.mxu0 %v82
    %v84 = vand.u32 %v65, 4294901760
    %85 = vmatpush.msra.mxu0 %v84
    %v86 = vand.u32 %v64, 4294901760
    %87 = vmatpush.msra.mxu0 %v86
    %v88 = vand.u32 %v63, 4294901760
    %89 = vmatpush.msra.mxu0 %v88
    %v90 = vand.u32 %v62, 4294901760
    %91 = vmatpush.msra.mxu0 %v90
    %v92 = vand.u32 %v61, 4294901760
    %93 = vmatpush.msra.mxu0 %v92
    %v94 = vand.u32 %v60, 4294901760
    %95 = vmatpush.msra.mxu0 %v94
    %v96 = vand.u32 %v59, 4294901760
    %97 = vmatpush.msra.mxu0 %v96
    %v98 = vand.u32 %v69, 4294901760
    %v99 = vsub.f32 %v69, %v98
    %v100 = vand.u32 %v99, 4294901760
    %v101 = vsub.f32 %v99, %v100
    %v102 = vand.u32 %v101, 4294901760
    %103 = vmatmul.f32.gmra.mxu0 %v102
    %v104 = vpop.f32.mrf.mxu0
    %v105 = vadd.f32 0.0, %v104
    %v106 = vand.u32 %v72, 4294901760
    %v107 = vsub.f32 %v72, %v106
    %v108 = vand.u32 %v107, 4294901760
    %v109 = vsub.f32 %v107, %v108
    %v110 = vand.u32 %v109, 4294901760
    %111 = vmatmul.f32.gmra.mxu0 %v110
    %v112 = vpop.f32.mrf.mxu0
    %v113 = vadd.f32 0.0, %v112
    %114 = vdwg.mxu0
    %115 = vmatpush.msra.mxu0 0.0
    %116 = vmatpush.msra.mxu0 0.0
    %117 = vmatpush.msra.mxu0 0.0
    %118 = vmatpush.msra.mxu0 0.0
    %119 = vmatpush.msra.mxu0 0.0
    %120 = vmatpush.msra.mxu0 0.0
    %121 = vmatpush.msra.mxu0 0.0
    %122 = vmatpush.msra.mxu0 0.0
    %v123 = vand.u32 %v66, 4294901760
    %v124 = vsub.f32 %v66, %v123
    %v125 = vand.u32 %v124, 4294901760
    %v126 = vsub.f32 %v124, %v125
    %v127 = vand.u32 %v126, 4294901760
    %128 = vmatpush.msra.mxu0 %v127
    %v129 = vand.u32 %v65, 4294901760
    %v130 = vsub.f32 %v65, %v129
    %v131 = vand.u32 %v130, 4294901760
    %v132 = vsub.f32 %v130, %v131
    %v133 = vand.u32 %v132, 4294901760
    %134 = vmatpush.msra.mxu0 %v133
    %v135 = vand.u32 %v64, 4294901760
    %v136 = vsub.f32 %v64, %v135
    %v137 = vand.u32 %v136, 4294901760
    %v138 = vsub.f32 %v136, %v137
    %v139 = vand.u32 %v138, 4294901760
    %140 = vmatpush.msra.mxu0 %v139
    %v141 = vand.u32 %v63, 4294901760
    %v142 = vsub.f32 %v63, %v141
    %v143 = vand.u32 %v142, 4294901760
    %v144 = vsub.f32 %v142, %v143
    %v145 = vand.u32 %v144, 4294901760
    %146 = vmatpush.msra.mxu0 %v145
    %v147 = vand.u32 %v62, 4294901760
    %v148 = vsub.f32 %v62, %v147
    %v149 = vand.u32 %v148, 4294901760
    %v150 = vsub.f32 %v148, %v149
    %v151 = vand.u32 %v150, 4294901760
    %152 = vmatpush.msra.mxu0 %v151
    %v153 = vand.u32 %v61, 4294901760
    %v154 = vsub.f32 %v61, %v153
    %v155 = vand.u32 %v154, 4294901760
    %v156 = vsub.f32 %v154, %v155
    %v157 = vand.u32 %v156, 4294901760
    %158 = vmatpush.msra.mxu0 %v157
    %v159 = vand.u32 %v60, 4294901760
    %v160 = vsub.f32 %v60, %v159
    %v161 = vand.u32 %v160, 4294901760
    %v162 = vsub.f32 %v160, %v161
    %v163 = vand.u32 %v162, 4294901760
    %164 = vmatpush.msra.mxu0 %v163
    %v165 = vand.u32 %v59, 4294901760
    %v166 = vsub.f32 %v59, %v165
    %v167 = vand.u32 %v166, 4294901760
    %v168 = vsub.f32 %v166, %v167
    %v169 = vand.u32 %v168, 4294901760
    %170 = vmatpush.msra.mxu0 %v169
    %v171 = vand.u32 %v69, 4294901760
    %172 = vmatmul.f32.gmra.mxu0 %v171
    %v173 = vpop.f32.mrf.mxu0
    %v174 = vadd.f32 %v105, %v173
    %v175 = vand.u32 %v72, 4294901760
    %176 = vmatmul.f32.gmra.mxu0 %v175
    %v177 = vpop.f32.mrf.mxu0
    %v178 = vadd.f32 %v113, %v177
    %179 = vdwg.mxu0
    %180 = vmatpush.msra.mxu0 0.0
    %181 = vmatpush.msra.mxu0 0.0
    %182 = vmatpush.msra.mxu0 0.0
    %183 = vmatpush.msra.mxu0 0.0
    %184 = vmatpush.msra.mxu0 0.0
    %185 = vmatpush.msra.mxu0 0.0
    %186 = vmatpush.msra.mxu0 0.0
    %187 = vmatpush.msra.mxu0 0.0
    %v188 = vand.u32 %v66, 4294901760
    %v189 = vsub.f32 %v66, %v188
    %190 = vmatpush.msra.mxu0 %v189
    %v191 = vand.u32 %v65, 4294901760
    %v192 = vsub.f32 %v65, %v191
    %193 = vmatpush.msra.mxu0 %v192
    %v194 = vand.u32 %v64, 4294901760
    %v195 = vsub.f32 %v64, %v194
    %196 = vmatpush.msra.mxu0 %v195
    %v197 = vand.u32 %v63, 4294901760
    %v198 = vsub.f32 %v63, %v197
    %199 = vmatpush.msra.mxu0 %v198
    %v200 = vand.u32 %v62, 4294901760
    %v201 = vsub.f32 %v62, %v200
    %202 = vmatpush.msra.mxu0 %v201
    %v203 = vand.u32 %v61, 4294901760
    %v204 = vsub.f32 %v61, %v203
    %205 = vmatpush.msra.mxu0 %v204
    %v206 = vand.u32 %v60, 4294901760
    %v207 = vsub.f32 %v60, %v206
    %208 = vmatpush.msra.mxu0 %v207
    %v209 = vand.u32 %v59, 4294901760
    %v210 = vsub.f32 %v59, %v209
    %211 = vmatpush.msra.mxu0 %v210
    %v212 = vand.u32 %v69, 4294901760
    %v213 = vsub.f32 %v69, %v212
    %214 = vmatmul.f32.gmra.mxu0 %v213
    %v215 = vpop.f32.mrf.mxu0
    %v216 = vadd.f32 %v174, %v215
    %v217 = vand.u32 %v72, 4294901760
    %v218 = vsub.f32 %v72, %v217
    %219 = vmatmul.f32.gmra.mxu0 %v218
    %v220 = vpop.f32.mrf.mxu0
    %v221 = vadd.f32 %v178, %v220
    %222 = vdwg.mxu0
    %223 = vmatpush.msra.mxu0 0.0
    %224 = vmatpush.msra.mxu0 0.0
    %225 = vmatpush.msra.mxu0 0.0
    %226 = vmatpush.msra.mxu0 0.0
    %227 = vmatpush.msra.mxu0 0.0
    %228 = vmatpush.msra.mxu0 0.0
    %229 = vmatpush.msra.mxu0 0.0
    %230 = vmatpush.msra.mxu0 0.0
    %v231 = vand.u32 %v66, 4294901760
    %232 = vmatpush.msra.mxu0 %v231
    %v233 = vand.u32 %v65, 4294901760
    %234 = vmatpush.msra.mxu0 %v233
    %v235 = vand.u32 %v64, 4294901760
    %236 = vmatpush.msra.mxu0 %v235
    %v237 = vand.u32 %v63, 4294901760
    %238 = vmatpush.msra.mxu0 %v237
    %v239 = vand.u32 %v62, 4294901760
    %240 = vmatpush.msra.mxu0 %v239
    %v241 = vand.u32 %v61, 4294901760
    %242 = vmatpush.msra.mxu0 %v241
    %v243 = vand.u32 %v60, 4294901760
    %244 = vmatpush.msra.mxu0 %v243
    %v245 = vand.u32 %v59, 4294901760
    %246 = vmatpush.msra.mxu0 %v245
    %v247 = vand.u32 %v69, 4294901760
    %v248 = vsub.f32 %v69, %v247
    %v249 = vand.u32 %v248, 4294901760
    %250 = vmatmul.f32.gmra.mxu0 %v249
    %v251 = vpop.f32.mrf.mxu0
    %v252 = vadd.f32 %v216, %v251
    %v253 = vand.u32 %v72, 4294901760
    %v254 = vsub.f32 %v72, %v253
    %v255 = vand.u32 %v254, 4294901760
    %256 = vmatmul.f32.gmra.mxu0 %v255
    %v257 = vpop.f32.mrf.mxu0
    %v258 = vadd.f32 %v221, %v257
    %259 = vdwg.mxu0
    %260 = vmatpush.msra.mxu0 0.0
    %261 = vmatpush.msra.mxu0 0.0
    %262 = vmatpush.msra.mxu0 0.0
    %263 = vmatpush.msra.mxu0 0.0
    %264 = vmatpush.msra.mxu0 0.0
    %265 = vmatpush.msra.mxu0 0.0
    %266 = vmatpush.msra.mxu0 0.0
    %267 = vmatpush.msra.mxu0 0.0
    %v268 = vand.u32 %v66, 4294901760
    %v269 = vsub.f32 %v66, %v268
    %v270 = vand.u32 %v269, 4294901760
    %271 = vmatpush.msra.mxu0 %v270
    %v272 = vand.u32 %v65, 4294901760
    %v273 = vsub.f32 %v65, %v272
    %v274 = vand.u32 %v273, 4294901760
    %275 = vmatpush.msra.mxu0 %v274
    %v276 = vand.u32 %v64, 4294901760
    %v277 = vsub.f32 %v64, %v276
    %v278 = vand.u32 %v277, 4294901760
    %279 = vmatpush.msra.mxu0 %v278
    %v280 = vand.u32 %v63, 4294901760
    %v281 = vsub.f32 %v63, %v280
    %v282 = vand.u32 %v281, 4294901760
    %283 = vmatpush.msra.mxu0 %v282
    %v284 = vand.u32 %v62, 4294901760
    %v285 = vsub.f32 %v62, %v284
    %v286 = vand.u32 %v285, 4294901760
    %287 = vmatpush.msra.mxu0 %v286
    %v288 = vand.u32 %v61, 4294901760
    %v289 = vsub.f32 %v61, %v288
    %v290 = vand.u32 %v289, 4294901760
    %291 = vmatpush.msra.mxu0 %v290
    %v292 = vand.u32 %v60, 4294901760
    %v293 = vsub.f32 %v60, %v292
    %v294 = vand.u32 %v293, 4294901760
    %295 = vmatpush.msra.mxu0 %v294
    %v296 = vand.u32 %v59, 4294901760
    %v297 = vsub.f32 %v59, %v296
    %v298 = vand.u32 %v297, 4294901760
    %299 = vmatpush.msra.mxu0 %v298
    %v300 = vand.u32 %v69, 4294901760
    %301 = vmatmul.f32.gmra.mxu0 %v300
    %v302 = vpop.f32.mrf.mxu0
    %v303 = vadd.f32 %v252, %v302
    %v304 = vand.u32 %v72, 4294901760
    %305 = vmatmul.f32.gmra.mxu0 %v304
    %v306 = vpop.f32.mrf.mxu0
    %v307 = vadd.f32 %v258, %v306
    %308 = vdwg.mxu0
    %309 = vmatpush.msra.mxu0 0.0
    %310 = vmatpush.msra.mxu0 0.0
    %311 = vmatpush.msra.mxu0 0.0
    %312 = vmatpush.msra.mxu0 0.0
    %313 = vmatpush.msra.mxu0 0.0
    %314 = vmatpush.msra.mxu0 0.0
    %315 = vmatpush.msra.mxu0 0.0
    %316 = vmatpush.msra.mxu0 0.0
    %v317 = vand.u32 %v66, 4294901760
    %318 = vmatpush.msra.mxu0 %v317
    %v319 = vand.u32 %v65, 4294901760
    %320 = vmatpush.msra.mxu0 %v319
    %v321 = vand.u32 %v64, 4294901760
    %322 = vmatpush.msra.mxu0 %v321
    %v323 = vand.u32 %v63, 4294901760
    %324 = vmatpush.msra.mxu0 %v323
    %v325 = vand.u32 %v62, 4294901760
    %326 = vmatpush.msra.mxu0 %v325
    %v327 = vand.u32 %v61, 4294901760
    %328 = vmatpush.msra.mxu0 %v327
    %v329 = vand.u32 %v60, 4294901760
    %330 = vmatpush.msra.mxu0 %v329
    %v331 = vand.u32 %v59, 4294901760
    %332 = vmatpush.msra.mxu0 %v331
    %v333 = vand.u32 %v69, 4294901760
    %334 = vmatmul.f32.gmra.mxu0 %v333
    %v335 = vpop.f32.mrf.mxu0
    %v336 = vadd.f32 %v303, %v335
    %v337 = vand.u32 %v72, 4294901760
    %338 = vmatmul.f32.gmra.mxu0 %v337
    %v339 = vpop.f32.mrf.mxu0
    %v340 = vadd.f32 %v307, %v339
    %341 = vdwg.mxu0
    %342 = vst [vmem:[#allocation5] sm:$0xff] %v336
    %343 = vst [vmem:[#allocation5 + $0x8] sm:$0xff] %v340
    // Predicated region
    $region18: #{tpu_custom_call.1} parent=1 // pred_check
      _
    $region19: #{tpu_custom_call.1} parent=1 // pred_check_branch
      %345 = sbr.rel (0) target = $region21
    $region20: #{tpu_custom_call.1} parent=1 // pred_region
      %347 = vsyncadd [#allocation4], 0
      %s348 = sshll.u32 [#allocation5], 4
      %s349 = int_to_ptr.vmem [resolvable:$true] %s348
      %s350 = sshll.u32 %s3, 4
      %s351 = int_to_ptr.hbm [resolvable:$true] %s350
      %356 = dma.vmem_to_hbm [thread:$0]  %s349, 256, %s351, [#allocation4], 128, 128, 8
    $region21: #{tpu_custom_call.1} parent=1 // pred_fallthru
      _
    // Predicated region
    $region22: #{tpu_custom_call.1} parent=1 // pred_check
      _
    $region23: #{tpu_custom_call.1} parent=1 // pred_check_branch
      %358 = sbr.rel (0) target = $region25
    $region24: #{tpu_custom_call.1} parent=1 // pred_region
      %360 = dma.done [#allocation4], 256
    $region25: #{tpu_custom_call.1} parent=1 // pred_fallthru
      _
    %361 = vsyncpa [#allocation3], 1
    %362 = vsyncpa [#allocation4], 1

</llo_original>
